<compile_context>
chip_gen: v7x
topology: tpu7x:2x2x1
jax: 0.10.0
libtpu: 0.0.40
codegen_flags: <defaults>
</compile_context>

<pallas_src>
import functools

import jax
import jax.numpy as jnp
from jax.experimental import pallas as pl
from jax.experimental.pallas import tpu as pltpu


def _wp_loss_kernel(has_mask, pred_ref, targ_ref, wmain_ref, wa0_ref, *rest):
    if has_mask:
        mask_ref, out_main_ref, out_a0_ref = rest
    else:
        mask_ref = None
        out_main_ref, out_a0_ref = rest

    # Cast to f32 in-vreg (free on v6e/v7x, mandatory before arithmetic on v5e).
    p = pred_ref[...].astype(jnp.float32)          # [TB, HT]
    t = targ_ref[...].astype(jnp.float32)          # [TB, HT]
    diff = p - t
    loss = diff * diff                             # elementwise L2 (VPU)

    weighted = loss * wmain_ref[...]               # [1, HT] broadcasts over rows
    if has_mask:
        weighted = weighted * mask_ref[...].astype(jnp.float32)

    p_main = jnp.sum(weighted)                     # per-block partial sums (f32)
    p_a0 = jnp.sum(loss * wa0_ref[...])            # wa0 is zero outside h==0 / t<action_dim

    out_main_ref[...] = jnp.broadcast_to(p_main, out_main_ref.shape)
    out_a0_ref[...] = jnp.broadcast_to(p_a0, out_a0_ref.shape)


def _reference(pred, targ, weights, action_dim, mask=None):
    loss = (pred.astype(jnp.float32) - targ.astype(jnp.float32)) ** 2
    w = weights.astype(jnp.float32)
    if mask is None:
        weighted_loss = jnp.mean(loss * w[None])
    else:
        weighted_loss = jnp.mean(loss * w[None] * mask.astype(jnp.float32))
    a0_loss = jnp.mean(loss[:, 0, :action_dim] / w[0, :action_dim])
    return weighted_loss, a0_loss


def weighted_policy_loss(pred, targ, weights, action_dim, mask=None,
                         *, use_kernel=None, target_block_bytes=1 << 20):
    """Returns (weighted_loss, {'a0_loss': a0_loss}) — both f32 scalars."""
    B, H, T = pred.shape
    assert targ.shape == (B, H, T)
    assert weights.shape == (H, T)
    HT = H * T

    if use_kernel is None:
        # Per-pallas_call overhead dwarfs the work at tiny sizes; let XLA fuse those.
        use_kernel = (B * HT) >= (1 << 15)
    if not use_kernel:
        wl, a0 = _reference(pred, targ, weights, action_dim, mask=mask)
        return wl, {'a0_loss': a0}

    inv_n_all = 1.0 / float(B * H * T)        # mask does NOT change normalization (matches PyTorch)
    inv_n_a0 = 1.0 / float(B * action_dim)

    # ---- per-(h,t) weight rows (tiny, precomputed in the wrapper) ----------
    w32 = weights.astype(jnp.float32)
    w_main = w32.reshape(1, HT)
    col = jnp.arange(T)
    a0_sel = col < action_dim
    # Masked reciprocal: avoids div-by-zero on unused lanes and removes the
    # divide / iota / select chain from the kernel body.
    inv_w0 = jnp.where(a0_sel, 1.0 / jnp.where(a0_sel, w32[0], 1.0), 0.0)
    w_a0 = jnp.zeros((H, T), jnp.float32).at[0].set(inv_w0).reshape(1, HT)

    # ---- lane-dense flattening ---------------------------------------------
    pred2 = pred.reshape(B, HT)
    targ2 = targ.reshape(B, HT)
    has_mask = mask is not None
    if has_mask:
        mask2 = mask.reshape(B, HT)
        if mask2.dtype == jnp.bool_:
            mask2 = mask2.astype(jnp.float32)

    # ---- row tiling (~target_block_bytes per input tile) -------------------
    itemsize = jnp.dtype(pred.dtype).itemsize
    rows_fit = max(1, int(target_block_bytes) // max(1, HT * itemsize))
    if rows_fit >= B:
        tb, b_pad = B, B                               # single block over rows
    else:
        tb = max(8, (rows_fit // 8) * 8)               # sublane-aligned row block
        b_pad = -(-B // tb) * tb
    if b_pad > B:
        padding = ((0, b_pad - B), (0, 0))             # zero rows -> zero loss contribution
        pred2 = jnp.pad(pred2, padding)
        targ2 = jnp.pad(targ2, padding)
        if has_mask:
            mask2 = jnp.pad(mask2, padding)
    num_blocks = b_pad // tb

    row_spec = pl.BlockSpec((tb, HT), lambda i: (i, 0))
    wrow_spec = pl.BlockSpec((1, HT), lambda i: (0, 0))
    in_specs = [row_spec, row_spec, wrow_spec, wrow_spec]
    args = [pred2, targ2, w_main, w_a0]
    if has_mask:
        in_specs.append(row_spec)
        args.append(mask2)

    # Per-block partial sums in native (8,128) tiles -> independent blocks per
    # grid step, so the grid axis can be "parallel" (v7x dual-TensorCore).
    out_block = pl.BlockSpec((1, 8, 128), lambda i: (i, 0, 0))
    out_shape = (jax.ShapeDtypeStruct((num_blocks, 8, 128), jnp.float32),
                 jax.ShapeDtypeStruct((num_blocks, 8, 128), jnp.float32))

    partial_main, partial_a0 = pl.pallas_call(
        functools.partial(_wp_loss_kernel, has_mask),
        grid=(num_blocks,),
        in_specs=in_specs,
        out_specs=(out_block, out_block),
        out_shape=out_shape,
        compiler_params=pltpu.CompilerParams(
            dimension_semantics=("parallel",)),
    )(*args)

    weighted_loss = jnp.sum(partial_main[:, 0, 0]) * inv_n_all
    a0_loss = jnp.sum(partial_a0[:, 0, 0]) * inv_n_a0
    return weighted_loss, {'a0_loss': a0_loss}


def _make_inputs(key, B, H, T, action_dim, dtype):
    k1, k2, k3 = jax.random.split(key, 3)
    pred = jax.random.normal(k1, (B, H, T), dtype=jnp.float32).astype(dtype)
    targ = jax.random.normal(k2, (B, H, T), dtype=jnp.float32).astype(dtype)
    disc = 0.99 ** jnp.arange(H, dtype=jnp.float32)                      # [H]
    dim_w = jnp.ones((T,), jnp.float32).at[:action_dim].set(10.0)        # [T]
    weights = disc[:, None] * dim_w[None, :]                             # [H, T]
    mask = (jax.random.uniform(k3, (B, H, T)) > 0.2).astype(jnp.float32)
    return pred, targ, weights, mask


if __name__ == "__main__":
    key = jax.random.PRNGKey(0)
    k1, k2, k3 = jax.random.split(key, 3)
    checks = []

    # Case 1: tiny demo shape (B=2, H=8, T=32), f32, forced through the kernel,
    # with and without mask.  (Auto-dispatch would use the fused-XLA path here.)
    action_dim = 4
    pred, targ, weights, mask = _make_inputs(k1, 2, 8, 32, action_dim, jnp.float32)
    for m in (None, mask):
        wl, ex = weighted_policy_loss(pred, targ, weights, action_dim,
                                      mask=m, use_kernel=True)
        jax.block_until_ready((wl, ex['a0_loss']))
        rwl, ra0 = _reference(pred, targ, weights, action_dim, mask=m)
        checks.append((wl, rwl, ex['a0_loss'], ra0, 1e-5, 1e-6))

    # Case 2: bf16 inputs, multi-block grid (small row-block target), with mask.
    action_dim = 6
    pred, targ, weights, mask = _make_inputs(k2, 64, 8, 32, action_dim, jnp.bfloat16)
    wl, ex = weighted_policy_loss(pred, targ, weights, action_dim, mask=mask,
                                  use_kernel=True, target_block_bytes=16 * 1024)
    jax.block_until_ready((wl, ex['a0_loss']))
    rwl, ra0 = _reference(pred, targ, weights, action_dim, mask=mask)
    checks.append((wl, rwl, ex['a0_loss'], ra0, 2e-5, 1e-5))

    # Case 3: B not a multiple of the row block -> exercises the zero-pad path.
    action_dim = 4
    pred, targ, weights, mask = _make_inputs(k3, 10, 8, 32, action_dim, jnp.float32)
    wl, ex = weighted_policy_loss(pred, targ, weights, action_dim,
                                  use_kernel=True, target_block_bytes=4 * 1024)
    jax.block_until_ready((wl, ex['a0_loss']))
    rwl, ra0 = _reference(pred, targ, weights, action_dim)
    checks.append((wl, rwl, ex['a0_loss'], ra0, 1e-5, 1e-6))

    for wl, rwl, a0, ra0, rtol, atol in checks:
        assert jnp.allclose(wl, rwl, rtol=rtol, atol=atol), (wl, rwl)
        assert jnp.allclose(a0, ra0, rtol=rtol, atol=atol), (a0, ra0)

    print("KERNEL_OK")
</pallas_src>

<mosaic_0001>
module attributes {stable_mosaic.version = 11 : i64} {
  func.func @_wp_loss_kernel(%arg0: i32, %arg1: memref<2x256xf32, #tpu.memory_space<vmem>>, %arg2: memref<2x256xf32, #tpu.memory_space<vmem>>, %arg3: memref<1x256xf32, #tpu.memory_space<vmem>>, %arg4: memref<1x256xf32, #tpu.memory_space<vmem>>, %arg5: memref<1x8x128xf32, #tpu.memory_space<vmem>>, %arg6: memref<1x8x128xf32, #tpu.memory_space<vmem>>) attributes {dimension_semantics = [#tpu.dimension_semantics<parallel>], iteration_bounds = array<i64: 1>, scalar_prefetch = 0 : i64, scratch_operands = 0 : i64, tpu.core_type = #tpu.core_type<tc>, window_params = [{transform_indices = @transform_0, window_bounds = array<i64: 2, 256>}, {transform_indices = @transform_1, window_bounds = array<i64: 2, 256>}, {pipeline_mode = #tpu.pipeline_mode<synchronous>, transform_indices = @transform_2, window_bounds = array<i64: 1, 256>}, {pipeline_mode = #tpu.pipeline_mode<synchronous>, transform_indices = @transform_3, window_bounds = array<i64: 1, 256>}, {transform_indices = @transform_4, window_bounds = array<i64: 1, 8, 128>}, {transform_indices = @transform_5, window_bounds = array<i64: 1, 8, 128>}]} {
    %c0 = arith.constant 0 : index
    %c0_0 = arith.constant 0 : index
    %0 = vector.load %arg1[%c0, %c0_0] : memref<2x256xf32, #tpu.memory_space<vmem>>, vector<2x256xf32>
    %c0_1 = arith.constant 0 : index
    %c0_2 = arith.constant 0 : index
    %1 = vector.load %arg2[%c0_1, %c0_2] : memref<2x256xf32, #tpu.memory_space<vmem>>, vector<2x256xf32>
    %2 = arith.subf %0, %1 : vector<2x256xf32>
    %3 = arith.mulf %2, %2 : vector<2x256xf32>
    %c0_3 = arith.constant 0 : index
    %c0_4 = arith.constant 0 : index
    %4 = vector.load %arg3[%c0_3, %c0_4] : memref<1x256xf32, #tpu.memory_space<vmem>>, vector<1x256xf32>
    %5 = vector.broadcast %4 : vector<1x256xf32> to vector<2x256xf32>
    %6 = arith.mulf %3, %5 : vector<2x256xf32>
    %7 = vector.shape_cast %6 : vector<2x256xf32> to vector<1x2x256xf32>
    %cst = arith.constant dense<0.000000e+00> : vector<1xf32>
    %8 = vector.multi_reduction <add>, %7, %cst [1, 2] : vector<1x2x256xf32> to vector<1xf32>
    %9 = vector.shape_cast %8 : vector<1xf32> to vector<1x1x1xf32>
    %10 = vector.extract %9[0, 0, 0] : f32 from vector<1x1x1xf32>
    %c0_5 = arith.constant 0 : index
    %c0_6 = arith.constant 0 : index
    %11 = vector.load %arg4[%c0_5, %c0_6] : memref<1x256xf32, #tpu.memory_space<vmem>>, vector<1x256xf32>
    %12 = vector.broadcast %11 : vector<1x256xf32> to vector<2x256xf32>
    %13 = arith.mulf %3, %12 : vector<2x256xf32>
    %14 = vector.shape_cast %13 : vector<2x256xf32> to vector<1x2x256xf32>
    %cst_7 = arith.constant dense<0.000000e+00> : vector<1xf32>
    %15 = vector.multi_reduction <add>, %14, %cst_7 [1, 2] : vector<1x2x256xf32> to vector<1xf32>
    %16 = vector.shape_cast %15 : vector<1xf32> to vector<1x1x1xf32>
    %17 = vector.extract %16[0, 0, 0] : f32 from vector<1x1x1xf32>
    %18 = vector.broadcast %10 : f32 to vector<1x8x128xf32>
    %c0_8 = arith.constant 0 : index
    %c0_9 = arith.constant 0 : index
    %c0_10 = arith.constant 0 : index
    %19 = vector.load %arg5[%c0_8, %c0_9, %c0_10] : memref<1x8x128xf32, #tpu.memory_space<vmem>>, vector<1x8x128xf32>
    tpu.vector_store %arg5[%c0_8, %c0_9, %c0_10], %18 {strides = array<i32>} : memref<1x8x128xf32, #tpu.memory_space<vmem>>, vector<1x8x128xf32>,
    %20 = vector.broadcast %17 : f32 to vector<1x8x128xf32>
    %c0_11 = arith.constant 0 : index
    %c0_12 = arith.constant 0 : index
    %c0_13 = arith.constant 0 : index
    %21 = vector.load %arg6[%c0_11, %c0_12, %c0_13] : memref<1x8x128xf32, #tpu.memory_space<vmem>>, vector<1x8x128xf32>
    tpu.vector_store %arg6[%c0_11, %c0_12, %c0_13], %20 {strides = array<i32>} : memref<1x8x128xf32, #tpu.memory_space<vmem>>, vector<1x8x128xf32>,
    return
  }
  func.func @transform_0(%arg0: i32) -> (i32, i32) {
    %c0_i32 = arith.constant 0 : i32
    %c0_i32_0 = arith.constant 0 : i32
    return %arg0, %c0_i32 : i32, i32
  }
  func.func @transform_1(%arg0: i32) -> (i32, i32) {
    %c0_i32 = arith.constant 0 : i32
    %c0_i32_0 = arith.constant 0 : i32
    return %arg0, %c0_i32 : i32, i32
  }
  func.func @transform_2(%arg0: i32) -> (i32, i32) {
    %c0_i32 = arith.constant 0 : i32
    %c0_i32_0 = arith.constant 0 : i32
    %c0_i32_1 = arith.constant 0 : i32
    return %c0_i32, %c0_i32_0 : i32, i32
  }
  func.func @transform_3(%arg0: i32) -> (i32, i32) {
    %c0_i32 = arith.constant 0 : i32
    %c0_i32_0 = arith.constant 0 : i32
    %c0_i32_1 = arith.constant 0 : i32
    return %c0_i32, %c0_i32_0 : i32, i32
  }
  func.func @transform_4(%arg0: i32) -> (i32, i32, i32) {
    %c0_i32 = arith.constant 0 : i32
    %c0_i32_0 = arith.constant 0 : i32
    %c0_i32_1 = arith.constant 0 : i32
    return %arg0, %c0_i32, %c0_i32_0 : i32, i32, i32
  }
  func.func @transform_5(%arg0: i32) -> (i32, i32, i32) {
    %c0_i32 = arith.constant 0 : i32
    %c0_i32_0 = arith.constant 0 : i32
    %c0_i32_1 = arith.constant 0 : i32
    return %arg0, %c0_i32, %c0_i32_0 : i32, i32, i32
  }
}

</mosaic_0001>

<llo_original>
// kernel: tpu_custom_call.1
$region0: #{tpu_custom_call.1}
  #allocation0 [shape = 'u32[]', space=smem, size = 0x4, offset = 0x4, fixed_abs, tag = 'smem constant byte address 0x4 - core index']
  #allocation1 [shape = 'u32[144,128]{1,0:T(1,128)}', space=vmem, size = 0x12000, scoped, tag = 'internal scratch']
  %s0 = inlined_call_operand.hbm [shape: f32[2,256], index: 0, kind: input, shape index: {}]
  %s1 = inlined_call_operand.hbm [shape: f32[2,256], index: 1, kind: input, shape index: {}]
  %s2 = inlined_call_operand.vmem [shape: f32[1,256], index: 2, kind: input, shape index: {}]
  %s3 = inlined_call_operand.vmem [shape: f32[1,256], index: 3, kind: input, shape index: {}]
  %s4 = inlined_call_operand.hbm [shape: f32[1,8,128], index: 4, kind: output, shape index: {0}]
  %s5 = inlined_call_operand.hbm [shape: f32[1,8,128], index: 5, kind: output, shape index: {1}]
  %6 = xla_tuple %s4, %s5
  %s7 = sld [smem:[#allocation0]]
  $region42: #{tpu_custom_call.1} parent=0
    _
  %s9 = ssub.s32 1, %s7
  %s10 = scalar_select 0, %s9, %s7
  $region1: #{tpu_custom_call.1} parent=0
    #allocation2 [shape = 'u8[2048]{0}', space=vmem, size = 0x800, scoped, tag = 'input window, operand 0, single buffered']
    #allocation3 [shape = 's32[1]{0}', space=sflag, size = 0x4, scoped, tag = 'scoped memory for tpu_custom_call.1']
    #allocation4 [shape = 's32[1]{0}', space=sflag, size = 0x4, scoped, tag = 'scoped memory for tpu_custom_call.1']
    #allocation5 [shape = 'u8[2048]{0}', space=vmem, size = 0x800, scoped, tag = 'input window, operand 1, single buffered']
    #allocation6 [shape = 's32[1]{0}', space=sflag, size = 0x4, scoped, tag = 'scoped memory for tpu_custom_call.1']
    #allocation7 [shape = 'u8[4096]{0}', space=vmem, size = 0x1000, scoped, tag = 'output window, operand 0, single buffered']
    #allocation8 [shape = 'u8[4096]{0}', space=vmem, size = 0x1000, scoped, tag = 'output window, operand 1, single buffered']
    #allocation9 [shape = 's32[1]{0}', space=sflag, size = 0x4, scoped, tag = 'scoped memory for tpu_custom_call.1']
    %11 = vsyncpa [#allocation3], 0
    %12 = vsyncpa [#allocation6], 0
    %13 = vsyncpa [#allocation4], 0
    %14 = vsyncpa [#allocation9], 0
    // Predicated region
    $region2: #{tpu_custom_call.1} parent=1 // pred_check
      _
    $region3: #{tpu_custom_call.1} parent=1 // pred_check_branch
      %16 = sbr.rel (0) target = $region5
    $region4: #{tpu_custom_call.1} parent=1 // pred_region
      %s18 = ssub.s32 64, 64
      %19 = vsyncadd [#allocation3], %s18
      %s21 = sshll.u32 [#allocation2], 4
      %s22 = int_to_ptr.vmem [resolvable:$true] %s21
      %24 = dma.hbm_to_vmem [thread:$0]  %s0, 64, %s22, [#allocation3]
    $region5: #{tpu_custom_call.1} parent=1 // pred_fallthru
      _
    // Predicated region
    $region6: #{tpu_custom_call.1} parent=1 // pred_check
      _
    $region7: #{tpu_custom_call.1} parent=1 // pred_check_branch
      %26 = sbr.rel (0) target = $region9
    $region8: #{tpu_custom_call.1} parent=1 // pred_region
      %s28 = ssub.s32 64, 64
      %29 = vsyncadd [#allocation6], %s28
      %s31 = sshll.u32 [#allocation5], 4
      %s32 = int_to_ptr.vmem [resolvable:$true] %s31
      %34 = dma.hbm_to_vmem [thread:$0]  %s1, 64, %s32, [#allocation6]
    $region9: #{tpu_custom_call.1} parent=1 // pred_fallthru
      _
    // Predicated region
    $region10: #{tpu_custom_call.1} parent=1 // pred_check
      _
    $region11: #{tpu_custom_call.1} parent=1 // pred_check_branch
      %36 = sbr.rel (0) target = $region13
    $region12: #{tpu_custom_call.1} parent=1 // pred_region
      _
    $region13: #{tpu_custom_call.1} parent=1 // pred_fallthru
      _
    // Predicated region
    $region14: #{tpu_custom_call.1} parent=1 // pred_check
      _
    $region15: #{tpu_custom_call.1} parent=1 // pred_check_branch
      %38 = sbr.rel (0) target = $region17
    $region16: #{tpu_custom_call.1} parent=1 // pred_region
      _
    $region17: #{tpu_custom_call.1} parent=1 // pred_fallthru
      _
    // Predicated region
    $region18: #{tpu_custom_call.1} parent=1 // pred_check
      _
    $region19: #{tpu_custom_call.1} parent=1 // pred_check_branch
      %40 = sbr.rel (0) target = $region21
    $region20: #{tpu_custom_call.1} parent=1 // pred_region
      %41 = dma.done [#allocation3], 64
    $region21: #{tpu_custom_call.1} parent=1 // pred_fallthru
      _
    // Predicated region
    $region22: #{tpu_custom_call.1} parent=1 // pred_check
      _
    $region23: #{tpu_custom_call.1} parent=1 // pred_check_branch
      %43 = sbr.rel (0) target = $region25
    $region24: #{tpu_custom_call.1} parent=1 // pred_region
      %44 = dma.done [#allocation6], 64
    $region25: #{tpu_custom_call.1} parent=1 // pred_fallthru
      _
    %v45 = vld [vmem:[#allocation2] sm:$0xf]
    %v46 = vld [vmem:[#allocation5] sm:$0xf]
    %v47 = vsub.f32 %v45, %v46
    %v48 = vmul.f32 %v47, %v47
    %v49 = vld [vmem:[%s2] sm:$0x3]
    %v51 = vlaneseq
    %v52 = vshrl.u32 %v51, 7
    %v53 = vsub.s32 0, %v52
    %v54 = vrot.slane %v49, %v53
    %v55 = vlaneseq
    %v56 = vshrl.u32 %v55, 7
    %v57 = vsub.s32 1, %v56
    %v58 = vrot.slane %v49, %v57
    %v59 = vcombine.low %v54, %v58
    %v61 = vunpack.c.l.s4 1983009808
    %v62 = vunpack.c.0.s8 %v61
    %v63 = vlaneseq
    %v64 = vshrl.u32 %v63, 7
    %v65 = vsub.s32 %v62, %v64
    %v66 = vrot.slane %v59, %v65
    %v68 = vmul.f32 %v48, %v66
    %v71 = vunpack.c.l.s4 1983009808
    %v72 = vunpack.c.0.s8 %v71
    %v73 = vlaneseq
    %v74 = vshrl.u32 %v73, 7
    %v75 = vsub.s32 %v72, %v74
    %v76 = vrot.slane %v68, %v75
    %v77 = vcombine.high %v76, %v76
    %vm80 = vcmask 1041408
    %v81 = vsel %vm80, %v76, 0.0
    %v82 = vsel %vm80, %v77, 0.0
    %v83 = vadd.f32 %v81, %v82
    %84 = vadd.xlane.f32.xlu0 %v83
    %v85 = vpop.xlane.xlu0 %84
    %v86 = vrot.slane %v85, 4
    %v87 = vadd.f32 %v85, %v86
    %v88 = vrot.slane %v87, 2
    %v89 = vadd.f32 %v87, %v88
    %v90 = vrot.slane %v89, 1
    %v91 = vadd.f32 %v89, %v90
    %s92 = vtos %v91
    %v93 = vld [vmem:[%s3] sm:$0x3]
    %v95 = vlaneseq
    %v96 = vshrl.u32 %v95, 7
    %v97 = vsub.s32 0, %v96
    %v98 = vrot.slane %v93, %v97
    %v99 = vlaneseq
    %v100 = vshrl.u32 %v99, 7
    %v101 = vsub.s32 1, %v100
    %v102 = vrot.slane %v93, %v101
    %v103 = vcombine.low %v98, %v102
    %v105 = vunpack.c.l.s4 1983009808
    %v106 = vunpack.c.0.s8 %v105
    %v107 = vlaneseq
    %v108 = vshrl.u32 %v107, 7
    %v109 = vsub.s32 %v106, %v108
    %v110 = vrot.slane %v103, %v109
    %v112 = vmul.f32 %v48, %v110
    %v115 = vunpack.c.l.s4 1983009808
    %v116 = vunpack.c.0.s8 %v115
    %v117 = vlaneseq
    %v118 = vshrl.u32 %v117, 7
    %v119 = vsub.s32 %v116, %v118
    %v120 = vrot.slane %v112, %v119
    %v121 = vcombine.high %v120, %v120
    %v124 = vsel %vm80, %v120, 0.0
    %v125 = vsel %vm80, %v121, 0.0
    %v126 = vadd.f32 %v124, %v125
    %127 = vadd.xlane.f32.xlu0 %v126
    %v128 = vpop.xlane.xlu0 %127
    %v129 = vrot.slane %v128, 4
    %v130 = vadd.f32 %v128, %v129
    %v131 = vrot.slane %v130, 2
    %v132 = vadd.f32 %v130, %v131
    %v133 = vrot.slane %v132, 1
    %v134 = vadd.f32 %v132, %v133
    %s135 = vtos %v134
    %v136 = vstv %s92
    %137 = vst [vmem:[#allocation7] sm:$0xff] %v136
    %v138 = vstv %s135
    %139 = vst [vmem:[#allocation8] sm:$0xff] %v138
    // Predicated region
    $region26: #{tpu_custom_call.1} parent=1 // pred_check
      _
    $region27: #{tpu_custom_call.1} parent=1 // pred_check_branch
      %141 = sbr.rel (0) target = $region29
    $region28: #{tpu_custom_call.1} parent=1 // pred_region
      %s143 = ssub.s32 128, 128
      %144 = vsyncadd [#allocation4], %s143
      %s146 = sshll.u32 [#allocation7], 4
      %s147 = int_to_ptr.vmem [resolvable:$true] %s146
      %149 = dma.vmem_to_hbm [thread:$0]  %s147, 128, %s4, [#allocation4]
    $region29: #{tpu_custom_call.1} parent=1 // pred_fallthru
      _
    // Predicated region
    $region30: #{tpu_custom_call.1} parent=1 // pred_check
      _
    $region31: #{tpu_custom_call.1} parent=1 // pred_check_branch
      %151 = sbr.rel (0) target = $region33
    $region32: #{tpu_custom_call.1} parent=1 // pred_region
      %s153 = ssub.s32 128, 128
      %154 = vsyncadd [#allocation9], %s153
      %s156 = sshll.u32 [#allocation8], 4
      %s157 = int_to_ptr.vmem [resolvable:$true] %s156
      %159 = dma.vmem_to_hbm [thread:$0]  %s157, 128, %s5, [#allocation9]
    $region33: #{tpu_custom_call.1} parent=1 // pred_fallthru
      _
    // Predicated region
    $region34: #{tpu_custom_call.1} parent=1 // pred_check
      _
    $region35: #{tpu_custom_call.1} parent=1 // pred_check_branch
      %161 = sbr.rel (0) target = $region37
    $region36: #{tpu_custom_call.1} parent=1 // pred_region
      %162 = dma.done [#allocation4], 128
    $region37: #{tpu_custom_call.1} parent=1 // pred_fallthru
      _
    // Predicated region
    $region38: #{tpu_custom_call.1} parent=1 // pred_check
      _
    $region39: #{tpu_custom_call.1} parent=1 // pred_check_branch
      %164 = sbr.rel (0) target = $region41
    $region40: #{tpu_custom_call.1} parent=1 // pred_region
      %165 = dma.done [#allocation9], 128
    $region41: #{tpu_custom_call.1} parent=1 // pred_fallthru
      _
    %166 = vsyncpa [#allocation3], 1
    %167 = vsyncpa [#allocation6], 1
    %168 = vsyncpa [#allocation4], 1
    %169 = vsyncpa [#allocation9], 1

</llo_original>
